<compile_context>
chip_gen: v5e
topology: v5e:2x2
jax: 0.10.0
libtpu: 0.0.40
codegen_flags: <defaults>
</compile_context>

<pallas_src>
import jax
import jax.numpy as jnp
from jax.experimental import pallas as pl
from jax.experimental.pallas import tpu as pltpu

N_TAGS = 5
ID2TAG = ['B', 'I', 'E', 'S', 'O']
TAG2ID = {t: i for i, t in enumerate(ID2TAG)}
STARTS = ['B', 'S', 'O']
ENDS = ['E', 'S', 'O']
TRANSITIONS = [('B', 'E'), ('B', 'I'), ('I', 'E'), ('I', 'I'), ('E', 'B'),
               ('E', 'S'), ('E', 'O'), ('S', 'B'), ('S', 'S'), ('S', 'O'),
               ('O', 'B'), ('O', 'S'), ('O', 'O')]

LANES = 128
ROW_ALIGN = 32                        # int8 native tile is (32,128); also satisfies f32 (8,128)
VMEM_INPUT_BUDGET = 10 * 1024 * 1024  # double-buffered input bytes per grid step (safe on v5e/v6e/v7x)


def make_parameters():
    """Deterministic parameter init mirroring reset_parameters()."""
    trans_score = jnp.zeros((N_TAGS, N_TAGS), jnp.float32)
    start_score = jnp.zeros((N_TAGS,), jnp.float32)
    end_score = jnp.zeros((N_TAGS,), jnp.float32)

    trans_mask = jnp.full((N_TAGS, N_TAGS), -jnp.inf, jnp.float32)
    start_mask = jnp.full((N_TAGS,), -jnp.inf, jnp.float32)
    end_mask = jnp.full((N_TAGS,), -jnp.inf, jnp.float32)
    for s in STARTS:
        start_mask = start_mask.at[TAG2ID[s]].set(0.0)
    for e in ENDS:
        end_mask = end_mask.at[TAG2ID[e]].set(0.0)
    for s, e in TRANSITIONS:
        trans_mask = trans_mask.at[TAG2ID[s], TAG2ID[e]].set(0.0)
    # NOTE: consumed only by viterbi_decode (not implemented here); the loss path
    # does not use them.
    return dict(trans_score=trans_score, start_score=start_score, end_score=end_score,
                trans_mask=trans_mask, start_mask=start_mask, end_mask=end_mask)


def _round_up(x, m):
    return (x + m - 1) // m * m


def crf_srl_loss(s_arg_begin, s_arg_end, props, prd_mask):
    """Pallas equivalent of LinearCRFSemanticRoleLabeling.loss (scalar f32)."""
    B, S, _ = s_arg_begin.shape
    R = B * S
    if R == 0 or S == 0:
        return jnp.float32(jnp.nan)   # matches 0/0 behavior of the reference

    # Free, contiguous reshapes; scores keep their original dtype (kernel upcasts).
    sb2 = s_arg_begin.reshape(R, S)
    se2 = s_arg_end.reshape(R, S)

    # Pack gold_begin / gold_end / pad into ONE int8 plane (1 byte/elem of HBM traffic).
    gb = props[..., 0]
    ge = props[..., 1]
    pad = prd_mask[:, :, None] & prd_mask[:, None, :]
    code = (gb.astype(jnp.int8)
            | (ge.astype(jnp.int8) << 1)
            | (pad.astype(jnp.int8) << 2)).reshape(R, S)

    # ---- balanced, VMEM-budgeted block sizing with grid >= 2 when possible ----
    s_vmem = _round_up(S, LANES)                                  # lanes one row occupies in VMEM
    bytes_per_row = 2 * s_vmem * (sb2.dtype.itemsize + se2.dtype.itemsize + 1)  # x2: double buffer
    max_tr = max(ROW_ALIGN, (VMEM_INPUT_BUDGET // bytes_per_row) // ROW_ALIGN * ROW_ALIGN)

    grid_target = max(2, pl.cdiv(R, max_tr))      # >=2 blocks -> both v7x TensorCores + pipelining
    if grid_target > 2:
        grid_target = _round_up(grid_target, 2)   # even block count -> balanced across 2 TCs
    tr = _round_up(pl.cdiv(R, grid_target), ROW_ALIGN)
    grid = pl.cdiv(R, tr)
    need_row_mask = grid * tr > R                 # only the ragged tail block has garbage rows

    def kernel(sb_ref, se_ref, code_ref, out_ref):
        # sb_ref/se_ref : (tr, S) scores in input dtype (f32 or bf16)
        # code_ref      : (tr, S) int8; bit0 = gold_begin, bit1 = gold_end, bit2 = pad
        # out_ref       : (1, 8, S) f32 per-block partial sums
        sb = sb_ref[...].astype(jnp.float32)
        se = se_ref[...].astype(jnp.float32)
        code = code_ref[...]                      # keep int8; bit tests on the narrow type

        gold_b = (code & 1) != 0
        gold_e = (code & 2) != 0
        valid = (code & 4) != 0

        # -log(prob_of_gold_tag) = softplus(+/-sb) + softplus(+/-se):
        #   gold begin -> -log(sigmoid(sb)) = softplus(-sb); else softplus(sb); same for end.
        xb = jnp.where(gold_b, -sb, sb)
        xe = jnp.where(gold_e, -se, se)
        # Fused softplus pair: 2 exp + 1 log per element (EUP is the critical unit on v7x).
        nll = (jnp.maximum(xb, 0.0) + jnp.maximum(xe, 0.0)
               + jnp.log((1.0 + jnp.exp(-jnp.abs(xb))) * (1.0 + jnp.exp(-jnp.abs(xe)))))
        # F.binary_cross_entropy clamps log(prob) at -100 -> clamp nll at 100.
        nll = jnp.minimum(nll, 100.0)

        contrib = jnp.where(valid, nll, 0.0)
        if need_row_mask:
            # Mask rows of the (only) partial tail block; stale VMEM there is garbage.
            limit = R - pl.program_id(0) * tr
            row_ids = jax.lax.broadcasted_iota(jnp.int32, (tr, S), 0)
            contrib = jnp.where(row_ids < limit, contrib, 0.0)

        # Reduce to a native (8, S) partial (no sub-8-sublane stores, no cross-lane reduce);
        # the final tiny reduction happens in the wrapper.
        out_ref[0] = jnp.sum(contrib.reshape(tr // 8, 8, S), axis=0)

    in_spec = pl.BlockSpec((tr, S), lambda g: (g, 0))
    partials = pl.pallas_call(
        kernel,
        out_shape=jax.ShapeDtypeStruct((grid, 8, S), jnp.float32),
        grid=(grid,),
        in_specs=[in_spec, in_spec, in_spec],
        out_specs=pl.BlockSpec((1, 8, S), lambda g: (g, 0, 0)),
        compiler_params=pltpu.CompilerParams(
            dimension_semantics=("parallel",),          # per-block outputs -> race-free
            allow_input_fusion=[True, True, True]),     # let XLA fuse reshape / code-pack into DMA
    )(sb2, se2, code)

    total = jnp.sum(partials)
    # golds are one-hot over {B,E,S,O}, so the selected count equals sum(pad) = sum(len_b^2).
    lens = jnp.sum(prd_mask.astype(jnp.float32), axis=-1)
    count = jnp.sum(lens * lens)
    return total / count   # NaN if count == 0, matching PyTorch/reference behavior


def crf_srl_loss_ref(s_arg_begin, s_arg_end, props, prd_mask):
    """Pure-JAX reference mirroring the PyTorch loss()."""
    pad = prd_mask[:, :, None] & prd_mask[:, None, :]
    pB = jax.nn.sigmoid(s_arg_begin.astype(jnp.float32))
    pE = jax.nn.sigmoid(s_arg_end.astype(jnp.float32))
    probs = jnp.stack((pB * (1 - pE), (1 - pB) * pE, pB * pE, (1 - pB) * (1 - pE)), -1)
    gb, ge = props[..., 0], props[..., 1]
    golds = jnp.stack((gb & ~ge, ~gb & ge, gb & ge, ~gb & ~ge), -1)
    m = (golds & pad[..., None]).astype(jnp.float32)
    nll = -jnp.maximum(jnp.log(probs), -100.0)
    return jnp.sum(nll * m) / jnp.sum(m)


if __name__ == "__main__":
    B, S = 2, 8
    key = jax.random.PRNGKey(0)
    k1, k2, k3 = jax.random.split(key, 3)

    s_arg_begin = jax.random.normal(k1, (B, S, S), jnp.float32)
    s_arg_end = jax.random.normal(k2, (B, S, S), jnp.float32)
    props = jax.random.bernoulli(k3, 0.3, (B, S, S, 2))
    # deterministic sentence lengths 8 and 6
    lens = jnp.array([8, 6])
    prd_mask = jnp.arange(S)[None, :] < lens[:, None]

    params = make_parameters()  # shapes from __init__; used only by the viterbi path

    loss = jax.jit(crf_srl_loss)(s_arg_begin, s_arg_end, props, prd_mask)
    jax.block_until_ready(loss)

    ref = crf_srl_loss_ref(s_arg_begin, s_arg_end, props, prd_mask)
    assert jnp.abs(loss - ref) <= 1e-4 * jnp.maximum(1.0, jnp.abs(ref)), (loss, ref)

    print("KERNEL_OK")
</pallas_src>

<mosaic_0001>
module attributes {stable_mosaic.version = 11 : i64} {
  func.func @kernel(%arg0: i32, %arg1: memref<32x8xf32, #tpu.memory_space<vmem>>, %arg2: memref<32x8xf32, #tpu.memory_space<vmem>>, %arg3: memref<32x8xi8, #tpu.memory_space<vmem>>, %arg4: memref<1x8x8xf32, #tpu.memory_space<vmem>>) attributes {dimension_semantics = [#tpu.dimension_semantics<parallel>], iteration_bounds = array<i64: 1>, scalar_prefetch = 0 : i64, scratch_operands = 0 : i64, tpu.core_type = #tpu.core_type<tc>, window_params = [{transform_indices = @transform_0, window_bounds = array<i64: 32, 8>}, {transform_indices = @transform_1, window_bounds = array<i64: 32, 8>}, {transform_indices = @transform_2, window_bounds = array<i64: 32, 8>}, {transform_indices = @transform_3, window_bounds = array<i64: 1, 8, 8>}]} {
    %c0 = arith.constant 0 : index
    %c0_0 = arith.constant 0 : index
    %0 = vector.load %arg1[%c0, %c0_0] : memref<32x8xf32, #tpu.memory_space<vmem>>, vector<32x8xf32>
    %c0_1 = arith.constant 0 : index
    %c0_2 = arith.constant 0 : index
    %1 = vector.load %arg2[%c0_1, %c0_2] : memref<32x8xf32, #tpu.memory_space<vmem>>, vector<32x8xf32>
    %c0_3 = arith.constant 0 : index
    %c0_4 = arith.constant 0 : index
    %2 = vector.load %arg3[%c0_3, %c0_4] : memref<32x8xi8, #tpu.memory_space<vmem>>, vector<32x8xi8>
    %c1_i8 = arith.constant 1 : i8
    %3 = vector.broadcast %c1_i8 : i8 to vector<32x8xi8>
    %4 = arith.andi %2, %3 : vector<32x8xi8>
    %c0_i8 = arith.constant 0 : i8
    %5 = vector.broadcast %c0_i8 : i8 to vector<32x8xi8>
    %6 = arith.cmpi ne, %4, %5 : vector<32x8xi8>
    %c2_i8 = arith.constant 2 : i8
    %7 = vector.broadcast %c2_i8 : i8 to vector<32x8xi8>
    %8 = arith.andi %2, %7 : vector<32x8xi8>
    %c0_i8_5 = arith.constant 0 : i8
    %9 = vector.broadcast %c0_i8_5 : i8 to vector<32x8xi8>
    %10 = arith.cmpi ne, %8, %9 : vector<32x8xi8>
    %c4_i8 = arith.constant 4 : i8
    %11 = vector.broadcast %c4_i8 : i8 to vector<32x8xi8>
    %12 = arith.andi %2, %11 : vector<32x8xi8>
    %c0_i8_6 = arith.constant 0 : i8
    %13 = vector.broadcast %c0_i8_6 : i8 to vector<32x8xi8>
    %14 = arith.cmpi ne, %12, %13 : vector<32x8xi8>
    %cst = arith.constant 0.000000e+00 : f32
    %15 = vector.broadcast %cst : f32 to vector<32x8xf32>
    %16 = arith.subf %15, %0 : vector<32x8xf32>
    %17 = arith.select %6, %16, %0 : vector<32x8xi1>, vector<32x8xf32>
    %cst_7 = arith.constant 0.000000e+00 : f32
    %18 = vector.broadcast %cst_7 : f32 to vector<32x8xf32>
    %19 = arith.subf %18, %1 : vector<32x8xf32>
    %20 = arith.select %10, %19, %1 : vector<32x8xi1>, vector<32x8xf32>
    %cst_8 = arith.constant 0.000000e+00 : f32
    %21 = vector.broadcast %cst_8 : f32 to vector<32x8xf32>
    %22 = arith.maximumf %17, %21 : vector<32x8xf32>
    %cst_9 = arith.constant 0.000000e+00 : f32
    %23 = vector.broadcast %cst_9 : f32 to vector<32x8xf32>
    %24 = arith.maximumf %20, %23 : vector<32x8xf32>
    %25 = arith.addf %22, %24 : vector<32x8xf32>
    %26 = math.absf %17 : vector<32x8xf32>
    %cst_10 = arith.constant 0.000000e+00 : f32
    %27 = vector.broadcast %cst_10 : f32 to vector<32x8xf32>
    %28 = arith.subf %27, %26 : vector<32x8xf32>
    %29 = math.exp %28 : vector<32x8xf32>
    %cst_11 = arith.constant 1.000000e+00 : f32
    %30 = vector.broadcast %cst_11 : f32 to vector<32x8xf32>
    %31 = arith.addf %30, %29 : vector<32x8xf32>
    %32 = math.absf %20 : vector<32x8xf32>
    %cst_12 = arith.constant 0.000000e+00 : f32
    %33 = vector.broadcast %cst_12 : f32 to vector<32x8xf32>
    %34 = arith.subf %33, %32 : vector<32x8xf32>
    %35 = math.exp %34 : vector<32x8xf32>
    %cst_13 = arith.constant 1.000000e+00 : f32
    %36 = vector.broadcast %cst_13 : f32 to vector<32x8xf32>
    %37 = arith.addf %36, %35 : vector<32x8xf32>
    %38 = arith.mulf %31, %37 : vector<32x8xf32>
    %39 = math.log %38 : vector<32x8xf32>
    %40 = arith.addf %25, %39 : vector<32x8xf32>
    %cst_14 = arith.constant 1.000000e+02 : f32
    %41 = vector.broadcast %cst_14 : f32 to vector<32x8xf32>
    %42 = arith.minimumf %40, %41 : vector<32x8xf32>
    %cst_15 = arith.constant 0.000000e+00 : f32
    %43 = vector.broadcast %cst_15 : f32 to vector<32x8xf32>
    %44 = arith.select %14, %42, %43 : vector<32x8xi1>, vector<32x8xf32>
    %c32_i32 = arith.constant 32 : i32
    %45 = arith.muli %arg0, %c32_i32 : i32
    %c16_i32 = arith.constant 16 : i32
    %46 = arith.subi %c16_i32, %45 : i32
    %47 = tpu.iota {dimensions = array<i32: 0>} : vector<32x8xi32>
    %48 = vector.broadcast %46 : i32 to vector<32x8xi32>
    %49 = arith.cmpi slt, %47, %48 : vector<32x8xi32>
    %cst_16 = arith.constant 0.000000e+00 : f32
    %50 = vector.broadcast %cst_16 : f32 to vector<32x8xf32>
    %51 = arith.select %49, %44, %50 : vector<32x8xi1>, vector<32x8xf32>
    %52 = vector.shape_cast %51 : vector<32x8xf32> to vector<4x8x8xf32>
    %cst_17 = arith.constant dense<0.000000e+00> : vector<8x8xf32>
    %53 = vector.multi_reduction <add>, %52, %cst_17 [0] : vector<4x8x8xf32> to vector<8x8xf32>
    %c0_18 = arith.constant 0 : index
    %c0_19 = arith.constant 0 : index
    %c0_20 = arith.constant 0 : index
    %54 = vector.load %arg4[%c0_18, %c0_19, %c0_20] : memref<1x8x8xf32, #tpu.memory_space<vmem>>, vector<1x8x8xf32>
    %55 = vector.shape_cast %54 : vector<1x8x8xf32> to vector<8x8xf32>
    %56 = vector.shape_cast %53 : vector<8x8xf32> to vector<1x8x8xf32>
    tpu.vector_store %arg4[%c0_18, %c0_19, %c0_20], %56 {strides = array<i32>} : memref<1x8x8xf32, #tpu.memory_space<vmem>>, vector<1x8x8xf32>,
    return
  }
  func.func @transform_0(%arg0: i32) -> (i32, i32) {
    %c0_i32 = arith.constant 0 : i32
    %c0_i32_0 = arith.constant 0 : i32
    return %arg0, %c0_i32 : i32, i32
  }
  func.func @transform_1(%arg0: i32) -> (i32, i32) {
    %c0_i32 = arith.constant 0 : i32
    %c0_i32_0 = arith.constant 0 : i32
    return %arg0, %c0_i32 : i32, i32
  }
  func.func @transform_2(%arg0: i32) -> (i32, i32) {
    %c0_i32 = arith.constant 0 : i32
    %c0_i32_0 = arith.constant 0 : i32
    return %arg0, %c0_i32 : i32, i32
  }
  func.func @transform_3(%arg0: i32) -> (i32, i32, i32) {
    %c0_i32 = arith.constant 0 : i32
    %c0_i32_0 = arith.constant 0 : i32
    %c0_i32_1 = arith.constant 0 : i32
    return %arg0, %c0_i32, %c0_i32_0 : i32, i32, i32
  }
}

</mosaic_0001>

<llo_original>
// kernel: crf_srl_loss.2
$region0: #{crf_srl_loss.2}
  #allocation0 [shape = 'u32[]', space=smem, size = 0x4, offset = 0x4, fixed_abs, tag = 'smem constant byte address 0x4 - core index']
  #allocation1 [shape = 'u32[72,128]{1,0:T(1,128)}', space=vmem, size = 0x9000, scoped, tag = 'internal scratch']
  #allocation2 [shape = 'u32[2048]{0}', space=vmem, size = 0x2000, scoped, tag = 'scoped memory for crf_srl_loss.2']
  #allocation3 [shape = 'u32[2048]{0}', space=vmem, size = 0x2000, scoped, tag = 'scoped memory for crf_srl_loss.2']
  #allocation4 [shape = 'u32[2048]{0}', space=vmem, size = 0x2000, scoped, tag = 'scoped memory for crf_srl_loss.2']
  #allocation5 [shape = 'u32[2048]{0}', space=vmem, size = 0x2000, scoped, tag = 'scoped memory for crf_srl_loss.2']
  #allocation6 [shape = 'u32[2048]{0}', space=vmem, size = 0x2000, scoped, tag = 'scoped memory for crf_srl_loss.2']
  #allocation7 [shape = 'u32[2048]{0}', space=vmem, size = 0x2000, scoped, tag = 'scoped memory for crf_srl_loss.2']
  #allocation8 [shape = 'u32[2048]{0}', space=vmem, size = 0x2000, scoped, tag = 'scoped memory for crf_srl_loss.2']
  #allocation9 [shape = 'u32[2048]{0}', space=vmem, size = 0x2000, scoped, tag = 'scoped memory for crf_srl_loss.2']
  #allocation10 [shape = 'u32[2048]{0}', space=vmem, size = 0x2000, scoped, tag = 'scoped memory for crf_srl_loss.2']
  #allocation11 [shape = 'u32[2048]{0}', space=vmem, size = 0x2000, scoped, tag = 'scoped memory for crf_srl_loss.2']
  %s0 = inlined_call_operand.vmem [shape: f32[2,8,8], index: 0, kind: input, shape index: {}]
  %s1 = inlined_call_operand.hbm [shape: f32[2,8,8], index: 1, kind: input, shape index: {}]
  %s2 = inlined_call_operand.hbm [shape: pred[2,8,8,2], index: 2, kind: input, shape index: {}]
  %s3 = inlined_call_operand.vmem [shape: pred[2,8], index: 3, kind: input, shape index: {}]
  %s4 = inlined_call_operand.vmem [shape: pred[16], index: 4, kind: input, shape index: {}]
  %s5 = inlined_call_operand.<no memory space> [shape: s8[], index: 5, kind: input, shape index: {}]
  %s6 = inlined_call_operand.<no memory space> [shape: s8[], index: 6, kind: input, shape index: {}]
  %s7 = inlined_call_operand.vmem [shape: f32[1,8,8], index: 7, kind: output, shape index: {}]
  %s8 = sld [smem:[#allocation0]]
  $region46: #{crf_srl_loss.2} parent=0
    _
  %s10 = ssub.s32 1, %s8
  %s11 = scalar_select 0, %s10, %s8
  %v12 = vstv %s5
  %v14 = vshll.u32 %v12, 24
  %v15 = vshra.s32 %v14, 24
  %v16 = vstv %s6
  %v18 = vshll.u32 %v16, 24
  %v19 = vshra.s32 %v18, 24
  $region1: #{crf_srl_loss.2} parent=0
    #allocation12 [shape = 'u8[8192]{0}', space=vmem, size = 0x2000, scoped, tag = 'operand span for operand 1']
    #allocation13 [shape = 's32[1]{0}', space=sflag, size = 0x4, scoped, tag = 'scoped memory for crf_srl_loss.2']
    #allocation14 [shape = 'u8[2048]{0}', space=vmem, size = 0x800, scoped, tag = 'operand span for operand 2']
    #allocation15 [shape = 's32[1]{0}', space=sflag, size = 0x4, scoped, tag = 'scoped memory for crf_srl_loss.2']
    #allocation16 [shape = 'u8[2048]{0}', space=vmem, size = 0x800, scoped, tag = 'operand span for operand 2']
    #allocation17 [shape = 'u8[16384]{0}', space=vmem, size = 0x4000, dematerialized = true, scoped, tag = 'FusionAdapter Buffer %fusion.2 = f32[16,8]{1,0:T(8,128)} fusion(%param_1.23), kind=kLoop, calls=%fused_computation.2.clone, metadata={op_name="jit(crf_srl_loss)/reshape" stack_frame_id=12}']
    #allocation18 [shape = 'u8[16384]{0}', space=vmem, size = 0x4000, dematerialized = true, scoped, tag = 'FusionAdapter Buffer %fusion.1 = f32[16,8]{1,0:T(8,128)} fusion(%param_0.24), kind=kLoop, calls=%fused_computation.1.clone, metadata={op_name="jit(crf_srl_loss)/reshape" stack_frame_id=13}']
    #allocation19 [shape = 'u8[4096]{0}', space=vmem, size = 0x1000, dematerialized = true, scoped, tag = 'FusionAdapter Buffer %fusion.7 = s8[16,8]{1,0:T(8,128)(4,1)} fusion(%param_2.15, %param_3.11, %param_4.9, %param_5.2, %param_6.2), kind=kLoop, calls=%fused_computation.9.clone.clone, metadata={op_name="jit(crf_srl_loss)/or" stack_frame_id=18}']
    %20 = vsyncpa [#allocation13], 0
    %21 = vsyncpa [#allocation15], 0
    // Predicated region
    $region2: #{crf_srl_loss.2} parent=1 // pred_check
      _
    $region3: #{crf_srl_loss.2} parent=1 // pred_check_branch
      %23 = sbr.rel (0) target = $region5
    $region4: #{crf_srl_loss.2} parent=1 // pred_region
      %25 = vsyncadd [#allocation13], 0
      %s26 = sshll.u32 %s1, 4
      %s27 = int_to_ptr.hbm [resolvable:$true] %s26
      %s28 = sshll.u32 [#allocation12], 4
      %s29 = int_to_ptr.vmem [resolvable:$true] %s28
      %34 = dma.hbm_to_vmem [thread:$0]  %s27, 256, %s29, [#allocation13], 128, 128, 8
    $region5: #{crf_srl_loss.2} parent=1 // pred_fallthru
      _
    // Predicated region
    $region6: #{crf_srl_loss.2} parent=1 // pred_check
      _
    $region7: #{crf_srl_loss.2} parent=1 // pred_check_branch
      %36 = sbr.rel (0) target = $region9
    $region8: #{crf_srl_loss.2} parent=1 // pred_region
      _
    $region9: #{crf_srl_loss.2} parent=1 // pred_fallthru
      _
    // Predicated region
    $region10: #{crf_srl_loss.2} parent=1 // pred_check
      _
    $region11: #{crf_srl_loss.2} parent=1 // pred_check_branch
      %38 = sbr.rel (0) target = $region13
    $region12: #{crf_srl_loss.2} parent=1 // pred_region
      %40 = vsyncadd [#allocation15], 0
      %s41 = sshll.u32 %s2, 4
      %s42 = int_to_ptr.hbm [resolvable:$true] %s41
      %s43 = sshll.u32 [#allocation14], 4
      %s44 = int_to_ptr.vmem [resolvable:$true] %s43
      %49 = dma.hbm_to_vmem [thread:$0]  %s42, 64, %s44, [#allocation15], 64, 32, 2
    $region13: #{crf_srl_loss.2} parent=1 // pred_fallthru
      _
    // Predicated region
    $region14: #{crf_srl_loss.2} parent=1 // pred_check
      _
    $region15: #{crf_srl_loss.2} parent=1 // pred_check_branch
      %51 = sbr.rel (0) target = $region17
    $region16: #{crf_srl_loss.2} parent=1 // pred_region
      %53 = vsyncadd [#allocation15], 0
      %s54 = scalar_lea.hbm %s2, 2
      %s55 = sshll.u32 %s54, 4
      %s56 = int_to_ptr.hbm [resolvable:$true] %s55
      %s57 = sshll.u32 [#allocation16], 4
      %s58 = int_to_ptr.vmem [resolvable:$true] %s57
      %63 = dma.hbm_to_vmem [thread:$0]  %s56, 64, %s58, [#allocation15], 64, 32, 2
    $region17: #{crf_srl_loss.2} parent=1 // pred_fallthru
      _
    // Predicated region
    $region18: #{crf_srl_loss.2} parent=1 // pred_check
      _
    $region19: #{crf_srl_loss.2} parent=1 // pred_check_branch
      %65 = sbr.rel (0) target = $region21
    $region20: #{crf_srl_loss.2} parent=1 // pred_region
      _
    $region21: #{crf_srl_loss.2} parent=1 // pred_fallthru
      _
    // Predicated region
    $region22: #{crf_srl_loss.2} parent=1 // pred_check
      _
    $region23: #{crf_srl_loss.2} parent=1 // pred_check_branch
      %67 = sbr.rel (0) target = $region25
    $region24: #{crf_srl_loss.2} parent=1 // pred_region
      _
    $region25: #{crf_srl_loss.2} parent=1 // pred_fallthru
      _
    // Predicated region
    $region26: #{crf_srl_loss.2} parent=1 // pred_check
      _
    $region27: #{crf_srl_loss.2} parent=1 // pred_check_branch
      %69 = sbr.rel (0) target = $region29
    $region28: #{crf_srl_loss.2} parent=1 // pred_region
      %71 = dma.done [#allocation13], 256
    $region29: #{crf_srl_loss.2} parent=1 // pred_fallthru
      _
    // Predicated region
    $region30: #{crf_srl_loss.2} parent=1 // pred_check
      _
    $region31: #{crf_srl_loss.2} parent=1 // pred_check_branch
      %73 = sbr.rel (0) target = $region33
    $region32: #{crf_srl_loss.2} parent=1 // pred_region
      %75 = dma.done [#allocation15], 64
    $region33: #{crf_srl_loss.2} parent=1 // pred_fallthru
      _
    // Predicated region
    $region34: #{crf_srl_loss.2} parent=1 // pred_check
      _
    $region35: #{crf_srl_loss.2} parent=1 // pred_check_branch
      %77 = sbr.rel (0) target = $region37
    $region36: #{crf_srl_loss.2} parent=1 // pred_region
      %79 = dma.done [#allocation15], 64
    $region37: #{crf_srl_loss.2} parent=1 // pred_fallthru
      _
    %v80 = vld [vmem:[#allocation12] sm:$0xff]
    %s82 = ssub.s32 256, 1
    %83 = vst [vmem:[#allocation17] sm:%s82] %v80
    %s84 = scalar_lea.vmem [#allocation12], 8
    %v85 = vld [vmem:[%s84] sm:$0xff]
    %s86 = scalar_lea.vmem [#allocation17], 8
    %s88 = ssub.s32 256, 1
    %89 = vst [vmem:[%s86] sm:%s88] %v85
    %s90 = scalar_lea.vmem [#allocation17], 16
    %s92 = ssub.s32 256, 1
    %93 = vst [vmem:[%s90] sm:%s92] 0
    %s94 = scalar_lea.vmem [#allocation17], 24
    %s96 = ssub.s32 256, 1
    %97 = vst [vmem:[%s94] sm:%s96] 0
    %v98 = vld [vmem:[%s0] sm:$0xff]
    %s100 = ssub.s32 256, 1
    %101 = vst [vmem:[#allocation18] sm:%s100] %v98
    %s102 = scalar_lea.vmem %s0, 8
    %v103 = vld [vmem:[%s102] sm:$0xff]
    %s104 = scalar_lea.vmem [#allocation18], 8
    %s106 = ssub.s32 256, 1
    %107 = vst [vmem:[%s104] sm:%s106] %v103
    %s108 = scalar_lea.vmem [#allocation18], 16
    %s110 = ssub.s32 256, 1
    %111 = vst [vmem:[%s108] sm:%s110] 0
    %s112 = scalar_lea.vmem [#allocation18], 24
    %s114 = ssub.s32 256, 1
    %115 = vst [vmem:[%s112] sm:%s114] 0
    %v116 = vld [vmem:[#allocation14] sm:$0x3]
    %v117 = vunpack.c.0.s8 %v116
    %v118 = vunpack.c.1.s8 %v116
    %v119 = vunpack.c.2.s8 %v116
    %v120 = vunpack.c.3.s8 %v116
    %v121 = vld [vmem:[#allocation16] sm:$0x3]
    %v122 = vunpack.c.0.s8 %v121
    %v123 = vunpack.c.1.s8 %v121
    %v124 = vunpack.c.2.s8 %v121
    %v125 = vunpack.c.3.s8 %v121
    %v126 = vld [vmem:[%s3] ss:$0 sm:$0xff]
    %v128 = vshra.s32 %v126, 0
    %v129 = vand.u32 %v128, 255
    %v130 = vld [vmem:[%s4] ss:$0 sm:$0xff]
    %v132 = vshra.s32 %v130, 0
    %v133 = vand.u32 %v132, 255
    %v134 = vlaneseq
    %v135 = vshrl.u32 %v134, 7
    %137 = vset.pattern.permute.xlu0 %v135
    %138 = vperm.xlu0 %137, %v133
    %v139 = vpop.permute.xlu0 %138
    %140 = xla_tuple %v117
    %141 = xla_tuple %140
    %142 = xla_tuple %v117
    %143 = xla_tuple %v122
    %144 = xla_tuple %143
    %145 = xla_tuple %v122
    %v146 = vshll.u32 %v15, 24
    %v147 = vshra.s32.s8 %v146, 24
    %v148 = vshll.u32 %v122, %v147
    %v149 = vor.u32 %v117, %v148
    %v150 = vand.u32 %v139, %v129
    %151 = xla_tuple %v150
    %152 = xla_tuple %151
    %153 = xla_tuple %v150
    %v154 = vshll.u32 %v19, 24
    %v155 = vshra.s32.s8 %v154, 24
    %v156 = vshll.u32 %v150, %v155
    %v157 = vor.u32 %v149, %v156
    %s159 = ssub.s32 4, 1
    %v160 = vpack.c.b16 0, %v157
    %v161 = vpack.c.b8 0, %v160
    %162 = vst [vmem:[#allocation19] sm:%s159] %v161
    %s163 = scalar_lea.vmem [#allocation14], 2
    %v164 = vld [vmem:[%s163] sm:$0x3]
    %v165 = vunpack.c.0.s8 %v164
    %v166 = vunpack.c.1.s8 %v164
    %v167 = vunpack.c.2.s8 %v164
    %v168 = vunpack.c.3.s8 %v164
    %s169 = scalar_lea.vmem [#allocation16], 2
    %v170 = vld [vmem:[%s169] sm:$0x3]
    %v171 = vunpack.c.0.s8 %v170
    %v172 = vunpack.c.1.s8 %v170
    %v173 = vunpack.c.2.s8 %v170
    %v174 = vunpack.c.3.s8 %v170
    %v175 = vld [vmem:[%s3] ss:$0 sm:$0xff]
    %v177 = vshra.s32 %v175, 8
    %v178 = vand.u32 %v177, 255
    %v179 = vld [vmem:[%s4] ss:$0 sm:$0xff]
    %v181 = vshra.s32 %v179, 0
    %v182 = vand.u32 %v181, 255
    %v183 = vlaneseq
    %v184 = vshrl.u32 %v183, 7
    %v185 = vadd.s32 %v184, 8
    %186 = vset.pattern.permute.xlu0 %v185
    %187 = vperm.xlu0 %186, %v182
    %v188 = vpop.permute.xlu0 %187
    %189 = xla_tuple %v165
    %190 = xla_tuple %189
    %191 = xla_tuple %v165
    %192 = xla_tuple %v171
    %193 = xla_tuple %192
    %194 = xla_tuple %v171
    %v195 = vshll.u32 %v15, 24
    %v196 = vshra.s32.s8 %v195, 24
    %v197 = vshll.u32 %v171, %v196
    %v198 = vor.u32 %v165, %v197
    %v199 = vand.u32 %v188, %v178
    %200 = xla_tuple %v199
    %201 = xla_tuple %200
    %202 = xla_tuple %v199
    %v203 = vshll.u32 %v19, 24
    %v204 = vshra.s32.s8 %v203, 24
    %v205 = vshll.u32 %v199, %v204
    %v206 = vor.u32 %v198, %v205
    %s207 = scalar_lea.vmem [#allocation19], 2
    %s209 = ssub.s32 4, 1
    %v210 = vpack.c.b16 0, %v206
    %v211 = vpack.c.b8 0, %v210
    %212 = vst [vmem:[%s207] sm:%s209] %v211
    %v213 = vld [vmem:[%s3] ss:$0 sm:$0xff]
    %v215 = vshra.s32 %v213, 16
    %v216 = vand.u32 %v215, 255
    %v217 = vld [vmem:[%s4] ss:$0 sm:$0xff]
    %v219 = vshra.s32 %v217, 0
    %v220 = vand.u32 %v219, 255
    %v221 = vlaneseq
    %v222 = vshrl.u32 %v221, 7
    %v223 = vadd.s32 %v222, 16
    %224 = vset.pattern.permute.xlu0 %v223
    %225 = vperm.xlu0 %224, %v220
    %v226 = vpop.permute.xlu0 %225
    %227 = xla_tuple 0
    %228 = xla_tuple %227
    %229 = xla_tuple 0
    %230 = xla_tuple 0
    %231 = xla_tuple %230
    %232 = xla_tuple 0
    %v233 = vshll.u32 %v15, 24
    %v234 = vshra.s32.s8 %v233, 24
    %v235 = vshll.u32 0, %v234
    %v236 = vand.u32 %v226, %v216
    %237 = xla_tuple %v236
    %238 = xla_tuple %237
    %239 = xla_tuple %v236
    %v240 = vshll.u32 %v19, 24
    %v241 = vshra.s32.s8 %v240, 24
    %v242 = vshll.u32 %v236, %v241
    %v243 = vor.u32 %v235, %v242
    %s244 = scalar_lea.vmem [#allocation19], 4
    %s246 = ssub.s32 4, 1
    %v247 = vpack.c.b16 0, %v243
    %v248 = vpack.c.b8 0, %v247
    %249 = vst [vmem:[%s244] sm:%s246] %v248
    %v250 = vld [vmem:[%s3] ss:$0 sm:$0xff]
    %v252 = vshra.s32 %v250, 24
    %v253 = vand.u32 %v252, 255
    %v254 = vld [vmem:[%s4] ss:$0 sm:$0xff]
    %v256 = vshra.s32 %v254, 0
    %v257 = vand.u32 %v256, 255
    %v258 = vlaneseq
    %v259 = vshrl.u32 %v258, 7
    %v260 = vadd.s32 %v259, 24
    %261 = vset.pattern.permute.xlu0 %v260
    %262 = vperm.xlu0 %261, %v257
    %v263 = vpop.permute.xlu0 %262
    %264 = xla_tuple 0
    %265 = xla_tuple %264
    %266 = xla_tuple 0
    %267 = xla_tuple 0
    %268 = xla_tuple %267
    %269 = xla_tuple 0
    %v270 = vshll.u32 %v15, 24
    %v271 = vshra.s32.s8 %v270, 24
    %v272 = vshll.u32 0, %v271
    %v273 = vand.u32 %v263, %v253
    %274 = xla_tuple %v273
    %275 = xla_tuple %274
    %276 = xla_tuple %v273
    %v277 = vshll.u32 %v19, 24
    %v278 = vshra.s32.s8 %v277, 24
    %v279 = vshll.u32 %v273, %v278
    %v280 = vor.u32 %v272, %v279
    %s281 = scalar_lea.vmem [#allocation19], 6
    %s283 = ssub.s32 4, 1
    %v284 = vpack.c.b16 0, %v280
    %v285 = vpack.c.b8 0, %v284
    %286 = vst [vmem:[%s281] sm:%s283] %v285
    %v291 = vld [vmem:[#allocation17] sm:$0xff]
    %v292 = vld [vmem:[#allocation17 + $0x8] sm:$0xff]
    %v293 = vld [vmem:[#allocation17 + $0x10] sm:$0xff]
    %v294 = vld [vmem:[#allocation17 + $0x18] sm:$0xff]
    %v295 = vld [vmem:[#allocation18] sm:$0xff]
    %v296 = vld [vmem:[#allocation18 + $0x8] sm:$0xff]
    %v297 = vld [vmem:[#allocation18 + $0x10] sm:$0xff]
    %v298 = vld [vmem:[#allocation18 + $0x18] sm:$0xff]
    %v299 = vld [vmem:[#allocation19] sm:$0x3]
    %v300 = vld [vmem:[#allocation19 + $0x2] sm:$0x3]
    %v301 = vld [vmem:[#allocation19 + $0x4] sm:$0x3]
    %v302 = vld [vmem:[#allocation19 + $0x6] sm:$0x3]
    %v303 = vand.u32 %v299, 16843009
    %v304 = vand.u32 %v300, 16843009
    %v305 = vand.u32 %v301, 16843009
    %v306 = vand.u32 %v302, 16843009
    %vm307 = vnez %v303
    %vm308 = vnez %v304
    %vm309 = vnez %v305
    %vm310 = vnez %v306
    %v311 = vand.u32 %v299, 33686018
    %v312 = vand.u32 %v300, 33686018
    %v313 = vand.u32 %v301, 33686018
    %v314 = vand.u32 %v302, 33686018
    %vm315 = vnez %v311
    %vm316 = vnez %v312
    %vm317 = vnez %v313
    %vm318 = vnez %v314
    %v319 = vand.u32 %v299, 67372036
    %v320 = vand.u32 %v300, 67372036
    %v321 = vand.u32 %v301, 67372036
    %v322 = vand.u32 %v302, 67372036
    %vm323 = vnez %v319
    %vm324 = vnez %v320
    %vm325 = vnez %v321
    %vm326 = vnez %v322
    %v327 = vsub.f32 0.0, %v291
    %v328 = vsub.f32 0.0, %v292
    %v329 = vsub.f32 0.0, %v293
    %v330 = vsub.f32 0.0, %v294
    %v331 = vsel %vm307, 16843009, 0
    %v332 = vsel %vm308, 16843009, 0
    %v333 = vsel %vm309, 16843009, 0
    %v334 = vsel %vm310, 16843009, 0
    %v335 = vunpack.c.0.s8 %v331
    %v336 = vunpack.c.0.s8 %v332
    %v337 = vunpack.c.0.s8 %v333
    %v338 = vunpack.c.0.s8 %v334
    %vm339 = vcmp.ne.s32.totalorder %v335, 0
    %vm340 = vcmp.ne.s32.totalorder %v336, 0
    %vm341 = vcmp.ne.s32.totalorder %v337, 0
    %vm342 = vcmp.ne.s32.totalorder %v338, 0
    %v343 = vsel %vm339, %v327, %v291
    %v344 = vsel %vm340, %v328, %v292
    %v345 = vsel %vm341, %v329, %v293
    %v346 = vsel %vm342, %v330, %v294
    %v347 = vsub.f32 0.0, %v295
    %v348 = vsub.f32 0.0, %v296
    %v349 = vsub.f32 0.0, %v297
    %v350 = vsub.f32 0.0, %v298
    %v351 = vsel %vm315, 16843009, 0
    %v352 = vsel %vm316, 16843009, 0
    %v353 = vsel %vm317, 16843009, 0
    %v354 = vsel %vm318, 16843009, 0
    %v355 = vunpack.c.0.s8 %v351
    %v356 = vunpack.c.0.s8 %v352
    %v357 = vunpack.c.0.s8 %v353
    %v358 = vunpack.c.0.s8 %v354
    %vm359 = vcmp.ne.s32.totalorder %v355, 0
    %vm360 = vcmp.ne.s32.totalorder %v356, 0
    %vm361 = vcmp.ne.s32.totalorder %v357, 0
    %vm362 = vcmp.ne.s32.totalorder %v358, 0
    %v363 = vsel %vm359, %v347, %v295
    %v364 = vsel %vm360, %v348, %v296
    %v365 = vsel %vm361, %v349, %v297
    %v366 = vsel %vm362, %v350, %v298
    %v367 = vmax.f32 %v343, 0.0
    %v368 = vmax.f32 %v344, 0.0
    %v369 = vmax.f32 %v345, 0.0
    %v370 = vmax.f32 %v346, 0.0
    %v371 = vmax.f32 %v363, 0.0
    %v372 = vmax.f32 %v364, 0.0
    %v373 = vmax.f32 %v365, 0.0
    %v374 = vmax.f32 %v366, 0.0
    %v375 = vadd.f32 %v367, %v371
    %v376 = vadd.f32 %v368, %v372
    %v377 = vadd.f32 %v369, %v373
    %v378 = vadd.f32 %v370, %v374
    %v379 = vand.u32 2147483647, %v343
    %v380 = vand.u32 2147483647, %v344
    %v381 = vand.u32 2147483647, %v345
    %v382 = vand.u32 2147483647, %v346
    %v383 = vsub.f32 0.0, %v379
    %v384 = vsub.f32 0.0, %v380
    %v385 = vsub.f32 0.0, %v381
    %v386 = vsub.f32 0.0, %v382
    %v387 = vmul.f32 %v383, 1.442695
    %v388 = vpow.pop %v387
    %v389 = vmul.f32 %v384, 1.442695
    %v390 = vpow.pop %v389
    %v391 = vmul.f32 %v385, 1.442695
    %v392 = vpow.pop %v391
    %v393 = vmul.f32 %v386, 1.442695
    %v394 = vpow.pop %v393
    %v395 = vadd.f32 %v388, 1.0
    %v396 = vadd.f32 %v390, 1.0
    %v397 = vadd.f32 %v392, 1.0
    %v398 = vadd.f32 %v394, 1.0
    %v399 = vand.u32 2147483647, %v363
    %v400 = vand.u32 2147483647, %v364
    %v401 = vand.u32 2147483647, %v365
    %v402 = vand.u32 2147483647, %v366
    %v403 = vsub.f32 0.0, %v399
    %v404 = vsub.f32 0.0, %v400
    %v405 = vsub.f32 0.0, %v401
    %v406 = vsub.f32 0.0, %v402
    %v407 = vmul.f32 %v403, 1.442695
    %v408 = vpow.pop %v407
    %v409 = vmul.f32 %v404, 1.442695
    %v410 = vpow.pop %v409
    %v411 = vmul.f32 %v405, 1.442695
    %v412 = vpow.pop %v411
    %v413 = vmul.f32 %v406, 1.442695
    %v414 = vpow.pop %v413
    %v415 = vadd.f32 %v408, 1.0
    %v416 = vadd.f32 %v410, 1.0
    %v417 = vadd.f32 %v412, 1.0
    %v418 = vadd.f32 %v414, 1.0
    %v419 = vmul.f32 %v395, %v415
    %v420 = vmul.f32 %v396, %v416
    %v421 = vmul.f32 %v397, %v417
    %v422 = vmul.f32 %v398, %v418
    %v423 = vlog2.pop %v419
    %v424 = vmul.f32 %v423, 0.6931472
    %v425 = vlog2.pop %v420
    %v426 = vmul.f32 %v425, 0.6931472
    %v427 = vlog2.pop %v421
    %v428 = vmul.f32 %v427, 0.6931472
    %v429 = vlog2.pop %v422
    %v430 = vmul.f32 %v429, 0.6931472
    %v431 = vadd.f32 %v375, %v424
    %v432 = vadd.f32 %v376, %v426
    %v433 = vadd.f32 %v377, %v428
    %v434 = vadd.f32 %v378, %v430
    %v435 = vmin.f32 %v431, 100.0
    %v436 = vmin.f32 %v432, 100.0
    %v437 = vmin.f32 %v433, 100.0
    %v438 = vmin.f32 %v434, 100.0
    %v439 = vsel %vm323, 16843009, 0
    %v440 = vsel %vm324, 16843009, 0
    %v441 = vsel %vm325, 16843009, 0
    %v442 = vsel %vm326, 16843009, 0
    %v443 = vunpack.c.0.s8 %v439
    %v444 = vunpack.c.0.s8 %v440
    %v445 = vunpack.c.0.s8 %v441
    %v446 = vunpack.c.0.s8 %v442
    %vm447 = vcmp.ne.s32.totalorder %v443, 0
    %vm448 = vcmp.ne.s32.totalorder %v444, 0
    %vm449 = vcmp.ne.s32.totalorder %v445, 0
    %vm450 = vcmp.ne.s32.totalorder %v446, 0
    %v451 = vsel %vm447, %v435, 0.0
    %v452 = vsel %vm448, %v436, 0.0
    %v453 = vsel %vm449, %v437, 0.0
    %v454 = vsel %vm450, %v438, 0.0
    %s455 = smul.u32 0, 32
    %s456 = ssub.s32 16, %s455
    %v457 = vlaneseq
    %v458 = vshrl.u32 %v457, 7
    %v459 = vadd.s32 %v458, 8
    %v460 = vadd.s32 %v458, 16
    %v461 = vadd.s32 %v458, 24
    %v462 = vstv %s456
    %vm463 = vcmp.lt.s32.totalorder %v458, %v462
    %vm464 = vcmp.lt.s32.totalorder %v459, %v462
    %vm465 = vcmp.lt.s32.totalorder %v460, %v462
    %vm466 = vcmp.lt.s32.totalorder %v461, %v462
    %v467 = vsel %vm463, %v451, 0.0
    %v468 = vsel %vm464, %v452, 0.0
    %v469 = vsel %vm465, %v453, 0.0
    %v470 = vsel %vm466, %v454, 0.0
    %vm471 = vcmask 64512
    %v472 = vsel %vm471, %v467, 0.0
    %v473 = vsel %vm471, %v468, 0.0
    %v474 = vadd.f32 %v472, %v473
    %v475 = vsel %vm471, %v469, 0.0
    %v476 = vadd.f32 %v474, %v475
    %v477 = vsel %vm471, %v470, 0.0
    %v478 = vadd.f32 %v476, %v477
    %479 = vst.msk [vmem:[%s7] sm:$0xff] %vm471, %v478
    // Predicated region
    $region38: #{crf_srl_loss.2} parent=1 // pred_check
      _
    $region39: #{crf_srl_loss.2} parent=1 // pred_check_branch
      %481 = sbr.rel (0) target = $region41
    $region40: #{crf_srl_loss.2} parent=1 // pred_region
      _
    $region41: #{crf_srl_loss.2} parent=1 // pred_fallthru
      _
    // Predicated region
    $region42: #{crf_srl_loss.2} parent=1 // pred_check
      _
    $region43: #{crf_srl_loss.2} parent=1 // pred_check_branch
      %483 = sbr.rel (0) target = $region45
    $region44: #{crf_srl_loss.2} parent=1 // pred_region
      _
    $region45: #{crf_srl_loss.2} parent=1 // pred_fallthru
      _
    %484 = vsyncpa [#allocation13], 1
    %485 = vsyncpa [#allocation15], 1

</llo_original>
